<compile_context>
chip_gen: v7x
topology: tpu7x:2x2x1
jax: 0.10.0
libtpu: 0.0.40
codegen_flags: <defaults>
</compile_context>

<pallas_src>
import jax
import jax.numpy as jnp
from jax.experimental import pallas as pl
from jax.experimental.pallas import tpu as pltpu


def actor_kernel(state_ref, eps_ref, w1_ref, b_ref, wh_ref, out_ref):
    out_dim = eps_ref.shape[0]
    hidden = w1_ref.shape[0]

    x = state_ref[...]                                    # (in_dim, TB)  bf16
    b1 = b_ref[0:hidden, :]                               # (hidden, 1)   f32
    bh = b_ref[hidden:, :]                                # (2*out_dim,1) f32

    # hidden = ReLU(W1 @ state_t + b1)  -> (hidden, TB), batch on lanes
    h = jnp.dot(w1_ref[...], x, preferred_element_type=jnp.float32) + b1
    h = jnp.maximum(h, 0.0)

    # fused heads: [mu_pre ; std_pre] = W_heads @ h + b_heads  -> (2*out_dim, TB)
    z = jnp.dot(wh_ref[...], h.astype(wh_ref.dtype),
                preferred_element_type=jnp.float32) + bh

    mu = jnp.tanh(z[:out_dim, :])                          # (out_dim, TB)
    # exp(softplus(t)) == 1 + exp(t)  -> single transcendental per element
    std = 1.0 + jnp.exp(z[out_dim:, :])                    # (out_dim, TB)
    action = mu + std * eps_ref[...]                       # (out_dim, TB)

    # lane-dense output slab [action ; mu ; std], written as sublane-row stores
    out_ref[0:out_dim, :] = action
    out_ref[out_dim:2 * out_dim, :] = mu
    out_ref[2 * out_dim:, :] = std


def _choose_tile(B):
    """Pick a lane-dense batch tile and the padded batch size."""
    if B <= 512:
        return B, B                       # single full-array tile (no padding needed)
    # large tile (cap 1024) but keep >= 2 grid steps so v7x megacore can shard it
    tb = min(1024, 128 * pl.cdiv(pl.cdiv(B, 2), 128))
    b_pad = tb * pl.cdiv(B, tb)
    return tb, b_pad


def actor_forward(state, params, eps):
    """Runs the Actor forward pass as a single fused Pallas kernel.

    Returns (action, mu, std) — (mu, std) fully parameterize the Normal dist.
    """
    B, in_dim = state.shape
    out_dim = eps.shape[1]
    hidden = params["w1"].shape[0]

    TB, B_pad = _choose_tile(B)
    grid = (B_pad // TB,)

    # Transposed, lane-dense operands: batch on the last (lane) axis.
    state_t = state.T.astype(jnp.bfloat16)                 # (in_dim, B)
    eps_t = eps.T                                          # (out_dim, B)
    if B_pad != B:
        state_t = jnp.pad(state_t, ((0, 0), (0, B_pad - B)))
        eps_t = jnp.pad(eps_t, ((0, 0), (0, B_pad - B)))

    packed = pl.pallas_call(
        actor_kernel,
        out_shape=jax.ShapeDtypeStruct((3 * out_dim, B_pad), jnp.float32),
        grid_spec=pltpu.PrefetchScalarGridSpec(
            num_scalar_prefetch=0,
            grid=grid,
            in_specs=[
                pl.BlockSpec((in_dim, TB), lambda i: (0, i)),           # state_t
                pl.BlockSpec((out_dim, TB), lambda i: (0, i)),          # eps_t
                pl.BlockSpec((hidden, in_dim), lambda i: (0, 0)),       # W1 (bf16)
                pl.BlockSpec((hidden + 2 * out_dim, 1), lambda i: (0, 0)),  # biases
                pl.BlockSpec((2 * out_dim, hidden), lambda i: (0, 0)),  # fused heads (bf16)
            ],
            out_specs=pl.BlockSpec((3 * out_dim, TB), lambda i: (0, i)),
        ),
        compiler_params=pltpu.CompilerParams(
            dimension_semantics=("parallel",)),
    )(state_t, eps_t, params["w1"], params["b_packed"], params["w_heads"])

    packed = packed[:, :B]
    action = packed[0:out_dim, :].T
    mu = packed[out_dim:2 * out_dim, :].T
    std = packed[2 * out_dim:, :].T
    return action, mu, std


def init_params(key, in_dim, out_dim, hidden=128):
    """Deterministic PyTorch-style (uniform) init, packed for the fused kernel.

    Weights are stored in PyTorch (out, in) orientation — exactly what the
    transposed kernel consumes — and in bf16 to halve weight DMA bytes and use
    the bf16-native MXU. Biases stay f32, packed into one (hidden+2*out, 1) column.
    """
    ks = jax.random.split(key, 6)

    def lin(kw, kb, fan_in, fan_out):
        bound = 1.0 / jnp.sqrt(fan_in)
        w = jax.random.uniform(kw, (fan_out, fan_in), jnp.float32, -bound, bound)
        b = jax.random.uniform(kb, (fan_out, 1), jnp.float32, -bound, bound)
        return w, b

    w1, b1 = lin(ks[0], ks[1], in_dim, hidden)             # (hidden, in_dim)
    wmu, bmu = lin(ks[2], ks[3], hidden, out_dim)          # (out_dim, hidden)
    wstd, bstd = lin(ks[4], ks[5], hidden, out_dim)        # (out_dim, hidden)

    w_heads = jnp.concatenate([wmu, wstd], axis=0)         # (2*out_dim, hidden)
    b_packed = jnp.concatenate([b1, bmu, bstd], axis=0)    # (hidden+2*out_dim, 1)

    return {
        "w1": w1.astype(jnp.bfloat16),
        "w_heads": w_heads.astype(jnp.bfloat16),
        "b_packed": b_packed,
    }


def reference_forward(state, params, eps):
    """Pure-JAX reference mirroring the module (and the kernel's bf16 operand rounding)."""
    out_dim = eps.shape[1]
    hidden = params["w1"].shape[0]
    w1 = params["w1"].astype(jnp.float32)                  # (hidden, in_dim)
    wh = params["w_heads"].astype(jnp.float32)             # (2*out_dim, hidden)
    b1 = params["b_packed"][:hidden, 0]
    bh = params["b_packed"][hidden:, 0]

    xs = state.astype(jnp.bfloat16).astype(jnp.float32)
    h = jnp.maximum(xs @ w1.T + b1, 0.0)
    hb = h.astype(jnp.bfloat16).astype(jnp.float32)
    z = hb @ wh.T + bh
    mu = jnp.tanh(z[:, :out_dim])
    log_std = jax.nn.softplus(z[:, out_dim:])
    std = jnp.exp(log_std)
    return mu + std * eps, mu, std


if __name__ == "__main__":
    B, IN_DIM, OUT_DIM = 8, 16, 4

    key = jax.random.PRNGKey(0)
    k_state, k_params, k_eps = jax.random.split(key, 3)

    state = jax.random.normal(k_state, (B, IN_DIM), jnp.float32)
    params = init_params(k_params, IN_DIM, OUT_DIM)
    # pre-sampled standard-normal noise for dist.sample() (reparameterized)
    eps = jax.random.normal(k_eps, (B, OUT_DIM), jnp.float32)

    action, mu, std = actor_forward(state, params, eps)
    jax.block_until_ready((action, mu, std))

    # sanity check against pure-JAX reference
    a_ref, mu_ref, std_ref = reference_forward(state, params, eps)
    assert jnp.allclose(action, a_ref, atol=1e-3, rtol=1e-3)
    assert jnp.allclose(mu, mu_ref, atol=1e-3, rtol=1e-3)
    assert jnp.allclose(std, std_ref, atol=1e-3, rtol=1e-3)

    print("KERNEL_OK")
</pallas_src>

<mosaic_0001>
module attributes {stable_mosaic.version = 11 : i64} {
  func.func @actor_kernel(%arg0: i32, %arg1: memref<16x8xbf16, #tpu.memory_space<vmem>>, %arg2: memref<4x8xf32, #tpu.memory_space<vmem>>, %arg3: memref<128x16xbf16, #tpu.memory_space<vmem>>, %arg4: memref<136x1xf32, #tpu.memory_space<vmem>>, %arg5: memref<8x128xbf16, #tpu.memory_space<vmem>>, %arg6: memref<12x8xf32, #tpu.memory_space<vmem>>) attributes {dimension_semantics = [#tpu.dimension_semantics<parallel>], iteration_bounds = array<i64: 1>, scalar_prefetch = 0 : i64, scratch_operands = 0 : i64, tpu.core_type = #tpu.core_type<tc>, window_params = [{transform_indices = @transform_0, window_bounds = array<i64: 16, 8>}, {transform_indices = @transform_1, window_bounds = array<i64: 4, 8>}, {pipeline_mode = #tpu.pipeline_mode<synchronous>, transform_indices = @transform_2, window_bounds = array<i64: 128, 16>}, {pipeline_mode = #tpu.pipeline_mode<synchronous>, transform_indices = @transform_3, window_bounds = array<i64: 136, 1>}, {pipeline_mode = #tpu.pipeline_mode<synchronous>, transform_indices = @transform_4, window_bounds = array<i64: 8, 128>}, {transform_indices = @transform_5, window_bounds = array<i64: 12, 8>}]} {
    %c0 = arith.constant 0 : index
    %c0_0 = arith.constant 0 : index
    %0 = vector.load %arg1[%c0, %c0_0] : memref<16x8xbf16, #tpu.memory_space<vmem>>, vector<16x8xbf16>
    %c0_1 = arith.constant 0 : index
    %c0_2 = arith.constant 0 : index
    %1 = vector.load %arg4[%c0_1, %c0_2] : memref<136x1xf32, #tpu.memory_space<vmem>>, vector<128x1xf32>
    %c128 = arith.constant 128 : index
    %c0_3 = arith.constant 0 : index
    %2 = vector.load %arg4[%c128, %c0_3] : memref<136x1xf32, #tpu.memory_space<vmem>>, vector<8x1xf32>
    %c0_4 = arith.constant 0 : index
    %c0_5 = arith.constant 0 : index
    %3 = vector.load %arg3[%c0_4, %c0_5] : memref<128x16xbf16, #tpu.memory_space<vmem>>, vector<128x16xbf16>
    %cst = arith.constant dense<0.000000e+00> : vector<128x8xf32>
    %4 = tpu.matmul %3, %0, %cst {dimension_numbers = #tpu.dot_dimension_numbers<[1], [0], [0], [1], [0, 0, 1, 1], [], []>} : vector<128x16xbf16>, vector<16x8xbf16>, vector<128x8xf32> -> vector<128x8xf32>
    %5 = vector.broadcast %1 : vector<128x1xf32> to vector<128x8xf32>
    %6 = arith.addf %4, %5 : vector<128x8xf32>
    %cst_6 = arith.constant 0.000000e+00 : f32
    %7 = vector.broadcast %cst_6 : f32 to vector<128x8xf32>
    %8 = arith.maximumf %6, %7 : vector<128x8xf32>
    %c0_7 = arith.constant 0 : index
    %c0_8 = arith.constant 0 : index
    %9 = vector.load %arg5[%c0_7, %c0_8] : memref<8x128xbf16, #tpu.memory_space<vmem>>, vector<8x128xbf16>
    %10 = arith.truncf %8 : vector<128x8xf32> to vector<128x8xbf16>
    %cst_9 = arith.constant dense<0.000000e+00> : vector<8x8xf32>
    %11 = tpu.matmul %9, %10, %cst_9 {dimension_numbers = #tpu.dot_dimension_numbers<[1], [0], [0], [1], [0, 0, 1, 1], [], []>} : vector<8x128xbf16>, vector<128x8xbf16>, vector<8x8xf32> -> vector<8x8xf32>
    %12 = vector.broadcast %2 : vector<8x1xf32> to vector<8x8xf32>
    %13 = arith.addf %11, %12 : vector<8x8xf32>
    %14 = vector.extract_strided_slice %13 {offsets = [0, 0], sizes = [4, 8], strides = [1, 1]} : vector<8x8xf32> to vector<4x8xf32>
    %15 = math.tanh %14 : vector<4x8xf32>
    %16 = vector.extract_strided_slice %13 {offsets = [4, 0], sizes = [4, 8], strides = [1, 1]} : vector<8x8xf32> to vector<4x8xf32>
    %17 = math.exp %16 : vector<4x8xf32>
    %cst_10 = arith.constant 1.000000e+00 : f32
    %18 = vector.broadcast %cst_10 : f32 to vector<4x8xf32>
    %19 = arith.addf %18, %17 : vector<4x8xf32>
    %c0_11 = arith.constant 0 : index
    %c0_12 = arith.constant 0 : index
    %20 = vector.load %arg2[%c0_11, %c0_12] : memref<4x8xf32, #tpu.memory_space<vmem>>, vector<4x8xf32>
    %21 = arith.mulf %19, %20 : vector<4x8xf32>
    %22 = arith.addf %15, %21 : vector<4x8xf32>
    %c0_13 = arith.constant 0 : index
    %c0_14 = arith.constant 0 : index
    %23 = vector.load %arg6[%c0_13, %c0_14] : memref<12x8xf32, #tpu.memory_space<vmem>>, vector<4x8xf32>
    tpu.vector_store %arg6[%c0_13, %c0_14], %22 {strides = array<i32>} : memref<12x8xf32, #tpu.memory_space<vmem>>, vector<4x8xf32>,
    %c4 = arith.constant 4 : index
    %c0_15 = arith.constant 0 : index
    %24 = vector.load %arg6[%c4, %c0_15] : memref<12x8xf32, #tpu.memory_space<vmem>>, vector<4x8xf32>
    tpu.vector_store %arg6[%c4, %c0_15], %15 {strides = array<i32>} : memref<12x8xf32, #tpu.memory_space<vmem>>, vector<4x8xf32>,
    %c8 = arith.constant 8 : index
    %c0_16 = arith.constant 0 : index
    %25 = vector.load %arg6[%c8, %c0_16] : memref<12x8xf32, #tpu.memory_space<vmem>>, vector<4x8xf32>
    tpu.vector_store %arg6[%c8, %c0_16], %19 {strides = array<i32>} : memref<12x8xf32, #tpu.memory_space<vmem>>, vector<4x8xf32>,
    return
  }
  func.func @transform_0(%arg0: i32) -> (i32, i32) {
    %c0_i32 = arith.constant 0 : i32
    %c0_i32_0 = arith.constant 0 : i32
    return %c0_i32, %arg0 : i32, i32
  }
  func.func @transform_1(%arg0: i32) -> (i32, i32) {
    %c0_i32 = arith.constant 0 : i32
    %c0_i32_0 = arith.constant 0 : i32
    return %c0_i32, %arg0 : i32, i32
  }
  func.func @transform_2(%arg0: i32) -> (i32, i32) {
    %c0_i32 = arith.constant 0 : i32
    %c0_i32_0 = arith.constant 0 : i32
    %c0_i32_1 = arith.constant 0 : i32
    return %c0_i32, %c0_i32_0 : i32, i32
  }
  func.func @transform_3(%arg0: i32) -> (i32, i32) {
    %c0_i32 = arith.constant 0 : i32
    %c0_i32_0 = arith.constant 0 : i32
    %c0_i32_1 = arith.constant 0 : i32
    return %c0_i32, %c0_i32_0 : i32, i32
  }
  func.func @transform_4(%arg0: i32) -> (i32, i32) {
    %c0_i32 = arith.constant 0 : i32
    %c0_i32_0 = arith.constant 0 : i32
    %c0_i32_1 = arith.constant 0 : i32
    return %c0_i32, %c0_i32_0 : i32, i32
  }
  func.func @transform_5(%arg0: i32) -> (i32, i32) {
    %c0_i32 = arith.constant 0 : i32
    %c0_i32_0 = arith.constant 0 : i32
    return %c0_i32, %arg0 : i32, i32
  }
}

</mosaic_0001>

<llo_original>
// kernel: tpu_custom_call.1
$region0: #{tpu_custom_call.1}
  #allocation0 [shape = 'u32[]', space=smem, size = 0x4, offset = 0x4, fixed_abs, tag = 'smem constant byte address 0x4 - core index']
  #allocation1 [shape = 'u32[144,128]{1,0:T(1,128)}', space=vmem, size = 0x12000, scoped, tag = 'internal scratch']
  %s0 = inlined_call_operand.vmem [shape: bf16[16,8], index: 0, kind: input, shape index: {}]
  %s1 = inlined_call_operand.vmem [shape: f32[4,8], index: 1, kind: input, shape index: {}]
  %s2 = inlined_call_operand.vmem [shape: bf16[128,16], index: 2, kind: input, shape index: {}]
  %s3 = inlined_call_operand.vmem [shape: f32[136,1], index: 3, kind: input, shape index: {}]
  %s4 = inlined_call_operand.vmem [shape: bf16[8,128], index: 4, kind: input, shape index: {}]
  %s5 = inlined_call_operand.vmem [shape: f32[12,8], index: 5, kind: output, shape index: {}]
  %s6 = sld [smem:[#allocation0]]
  $region30: #{tpu_custom_call.1} parent=0
    _
  %s8 = ssub.s32 1, %s6
  %s9 = scalar_select 0, %s8, %s6
  // Predicated region
  $region2: #{tpu_custom_call.1} parent=0 // pred_check
    _
  $region3: #{tpu_custom_call.1} parent=0 // pred_check_branch
    %11 = sbr.rel (0) target = $region5
  $region4: #{tpu_custom_call.1} parent=0 // pred_region
    _
  $region5: #{tpu_custom_call.1} parent=0 // pred_fallthru
    _
  // Predicated region
  $region6: #{tpu_custom_call.1} parent=0 // pred_check
    _
  $region7: #{tpu_custom_call.1} parent=0 // pred_check_branch
    %13 = sbr.rel (0) target = $region9
  $region8: #{tpu_custom_call.1} parent=0 // pred_region
    _
  $region9: #{tpu_custom_call.1} parent=0 // pred_fallthru
    _
  // Predicated region
  $region10: #{tpu_custom_call.1} parent=0 // pred_check
    _
  $region11: #{tpu_custom_call.1} parent=0 // pred_check_branch
    %15 = sbr.rel (0) target = $region13
  $region12: #{tpu_custom_call.1} parent=0 // pred_region
    _
  $region13: #{tpu_custom_call.1} parent=0 // pred_fallthru
    _
  // Predicated region
  $region14: #{tpu_custom_call.1} parent=0 // pred_check
    _
  $region15: #{tpu_custom_call.1} parent=0 // pred_check_branch
    %17 = sbr.rel (0) target = $region17
  $region16: #{tpu_custom_call.1} parent=0 // pred_region
    _
  $region17: #{tpu_custom_call.1} parent=0 // pred_fallthru
    _
  // Predicated region
  $region18: #{tpu_custom_call.1} parent=0 // pred_check
    _
  $region19: #{tpu_custom_call.1} parent=0 // pred_check_branch
    %19 = sbr.rel (0) target = $region21
  $region20: #{tpu_custom_call.1} parent=0 // pred_region
    _
  $region21: #{tpu_custom_call.1} parent=0 // pred_fallthru
    _
  %v21 = vld [vmem:[%s0] sm:$0xf]
  %v22 = vld [vmem:[%s0 + $0x4] sm:$0xf]
  %v23 = vld [vmem:[%s3] sm:$0xff]
  %v24 = vld [vmem:[%s3 + $0x8] sm:$0xff]
  %v25 = vld [vmem:[%s3 + $0x10] sm:$0xff]
  %v26 = vld [vmem:[%s3 + $0x18] sm:$0xff]
  %v27 = vld [vmem:[%s3 + $0x20] sm:$0xff]
  %v28 = vld [vmem:[%s3 + $0x28] sm:$0xff]
  %v29 = vld [vmem:[%s3 + $0x30] sm:$0xff]
  %v30 = vld [vmem:[%s3 + $0x38] sm:$0xff]
  %v31 = vld [vmem:[%s3 + $0x40] sm:$0xff]
  %v32 = vld [vmem:[%s3 + $0x48] sm:$0xff]
  %v33 = vld [vmem:[%s3 + $0x50] sm:$0xff]
  %v34 = vld [vmem:[%s3 + $0x58] sm:$0xff]
  %v35 = vld [vmem:[%s3 + $0x60] sm:$0xff]
  %v36 = vld [vmem:[%s3 + $0x68] sm:$0xff]
  %v37 = vld [vmem:[%s3 + $0x70] sm:$0xff]
  %v38 = vld [vmem:[%s3 + $0x78] sm:$0xff]
  %v39 = vld [vmem:[%s3 + $0x80] sm:$0xff]
  %v40 = vld [vmem:[%s2] sm:$0xf]
  %v41 = vld [vmem:[%s2 + $0x4] sm:$0xf]
  %v42 = vld [vmem:[%s2 + $0x8] sm:$0xf]
  %v43 = vld [vmem:[%s2 + $0xc] sm:$0xf]
  %v44 = vld [vmem:[%s2 + $0x10] sm:$0xf]
  %v45 = vld [vmem:[%s2 + $0x14] sm:$0xf]
  %v46 = vld [vmem:[%s2 + $0x18] sm:$0xf]
  %v47 = vld [vmem:[%s2 + $0x1c] sm:$0xf]
  %v48 = vld [vmem:[%s2 + $0x20] sm:$0xf]
  %v49 = vld [vmem:[%s2 + $0x24] sm:$0xf]
  %v50 = vld [vmem:[%s2 + $0x28] sm:$0xf]
  %v51 = vld [vmem:[%s2 + $0x2c] sm:$0xf]
  %v52 = vld [vmem:[%s2 + $0x30] sm:$0xf]
  %v53 = vld [vmem:[%s2 + $0x34] sm:$0xf]
  %v54 = vld [vmem:[%s2 + $0x38] sm:$0xf]
  %v55 = vld [vmem:[%s2 + $0x3c] sm:$0xf]
  %57 = vset.pattern.permute.xlu0 0
  %58 = vperm.xlu0 %57, %v23
  %v59 = vpop.permute.xlu0 %58
  %62 = vset.pattern.permute.xlu0 0
  %63 = vperm.xlu0 %62, %v24
  %v64 = vpop.permute.xlu0 %63
  %67 = vset.pattern.permute.xlu0 0
  %68 = vperm.xlu0 %67, %v25
  %v69 = vpop.permute.xlu0 %68
  %72 = vset.pattern.permute.xlu0 0
  %73 = vperm.xlu0 %72, %v26
  %v74 = vpop.permute.xlu0 %73
  %77 = vset.pattern.permute.xlu0 0
  %78 = vperm.xlu0 %77, %v27
  %v79 = vpop.permute.xlu0 %78
  %82 = vset.pattern.permute.xlu0 0
  %83 = vperm.xlu0 %82, %v28
  %v84 = vpop.permute.xlu0 %83
  %87 = vset.pattern.permute.xlu0 0
  %88 = vperm.xlu0 %87, %v29
  %v89 = vpop.permute.xlu0 %88
  %92 = vset.pattern.permute.xlu0 0
  %93 = vperm.xlu0 %92, %v30
  %v94 = vpop.permute.xlu0 %93
  %97 = vset.pattern.permute.xlu0 0
  %98 = vperm.xlu0 %97, %v31
  %v99 = vpop.permute.xlu0 %98
  %102 = vset.pattern.permute.xlu0 0
  %103 = vperm.xlu0 %102, %v32
  %v104 = vpop.permute.xlu0 %103
  %107 = vset.pattern.permute.xlu0 0
  %108 = vperm.xlu0 %107, %v33
  %v109 = vpop.permute.xlu0 %108
  %112 = vset.pattern.permute.xlu0 0
  %113 = vperm.xlu0 %112, %v34
  %v114 = vpop.permute.xlu0 %113
  %117 = vset.pattern.permute.xlu0 0
  %118 = vperm.xlu0 %117, %v35
  %v119 = vpop.permute.xlu0 %118
  %122 = vset.pattern.permute.xlu0 0
  %123 = vperm.xlu0 %122, %v36
  %v124 = vpop.permute.xlu0 %123
  %127 = vset.pattern.permute.xlu0 0
  %128 = vperm.xlu0 %127, %v37
  %v129 = vpop.permute.xlu0 %128
  %132 = vset.pattern.permute.xlu0 0
  %133 = vperm.xlu0 %132, %v38
  %v134 = vpop.permute.xlu0 %133
  %v152 = vunpack.c.l.b16 %v40
  %v153 = vunpack.c.l.b16 %v41
  %v154 = vunpack.c.l.b16 %v42
  %v155 = vunpack.c.l.b16 %v43
  %v156 = vunpack.c.l.b16 %v44
  %v157 = vunpack.c.l.b16 %v45
  %v158 = vunpack.c.l.b16 %v46
  %v159 = vunpack.c.l.b16 %v47
  %v160 = vunpack.c.l.b16 %v48
  %v161 = vunpack.c.l.b16 %v49
  %v162 = vunpack.c.l.b16 %v50
  %v163 = vunpack.c.l.b16 %v51
  %v164 = vunpack.c.l.b16 %v52
  %v165 = vunpack.c.l.b16 %v53
  %v166 = vunpack.c.l.b16 %v54
  %v167 = vunpack.c.l.b16 %v55
  %v168 = vpack.c.b16 %v153, %v152
  %v169 = vpack.c.b16 %v155, %v154
  %v170 = vpack.c.b16 %v157, %v156
  %v171 = vpack.c.b16 %v159, %v158
  %v172 = vpack.c.b16 %v161, %v160
  %v173 = vpack.c.b16 %v163, %v162
  %v174 = vpack.c.b16 %v165, %v164
  %v175 = vpack.c.b16 %v167, %v166
  %v178 = vunpack.c.l.b16 %v21
  %v179 = vunpack.c.l.b16 %v22
  %v180 = vpack.c.b16 %v179, %v178
  %vm182 = vcmask 130048
  %v184 = vsel %vm182, %v168, 0
  %v187 = vsel %vm182, %v169, 0
  %v190 = vsel %vm182, %v170, 0
  %v193 = vsel %vm182, %v171, 0
  %v196 = vsel %vm182, %v172, 0
  %v199 = vsel %vm182, %v173, 0
  %v202 = vsel %vm182, %v174, 0
  %v205 = vsel %vm182, %v175, 0
  %207 = vmatprep.subr.bf16.mxu0 0
  %208 = vmatpush1.bf16.msra.mxu0 %v180
  %209 = vmatprep.subr.bf16.mxu0 0
  %210 = vmatpush1.bf16.msra.mxu0 0
  %211 = vmatprep.subr.bf16.mxu0 0
  %212 = vmatpush1.bf16.msra.mxu0 0
  %213 = vmatprep.subr.bf16.mxu0 0
  %214 = vmatpush1.bf16.msra.mxu0 0
  %215 = vmatprep.subr.bf16.mxu0 0
  %216 = vmatpush1.bf16.msra.mxu0 0
  %217 = vmatprep.subr.bf16.mxu0 0
  %218 = vmatpush1.bf16.msra.mxu0 0
  %219 = vmatprep.subr.bf16.mxu0 0
  %220 = vmatpush1.bf16.msra.mxu0 0
  %221 = vmatprep.subr.bf16.mxu0 0
  %222 = vmatpush1.bf16.msra.mxu0 0
  %223 = vmatprep.subr.bf16.mxu0 0
  %224 = vmatpush1.bf16.msra.mxu0 0
  %225 = vmatprep.subr.bf16.mxu0 0
  %226 = vmatpush1.bf16.msra.mxu0 0
  %227 = vmatprep.subr.bf16.mxu0 0
  %228 = vmatpush1.bf16.msra.mxu0 0
  %229 = vmatprep.subr.bf16.mxu0 0
  %230 = vmatpush1.bf16.msra.mxu0 0
  %231 = vmatprep.subr.bf16.mxu0 0
  %232 = vmatpush1.bf16.msra.mxu0 0
  %233 = vmatprep.subr.bf16.mxu0 0
  %234 = vmatpush1.bf16.msra.mxu0 0
  %235 = vmatprep.subr.bf16.mxu0 0
  %236 = vmatpush1.bf16.msra.mxu0 0
  %237 = vmatprep.subr.bf16.mxu0 0
  %238 = vmatpush1.bf16.msra.mxu0 0
  %239 = vmatprep.mubr.bf16.mxu0 0
  %240 = vmatmul.mubr.bf16.gmra.mrb[0].mxu0 %v184
  %v241 = vpop.f32.mrb[0].mxu0
  %v242 = vadd.f32 %v59, %v241
  %v243 = vpop.f32.mrb[0].mxu0
  %v244 = vpop.f32.mrb[0].mxu0
  %v245 = vadd.f32 %v64, %v244
  %v246 = vpop.f32.mrb[0].mxu0
  %247 = vmatprep.mubr.bf16.mxu0 0
  %248 = vmatmul.mubr.bf16.gmra.mrb[0].mxu0 %v187
  %v249 = vpop.f32.mrb[0].mxu0
  %v250 = vadd.f32 %v69, %v249
  %v251 = vpop.f32.mrb[0].mxu0
  %v252 = vpop.f32.mrb[0].mxu0
  %v253 = vadd.f32 %v74, %v252
  %v254 = vpop.f32.mrb[0].mxu0
  %255 = vmatprep.mubr.bf16.mxu0 0
  %256 = vmatmul.mubr.bf16.gmra.mrb[0].mxu0 %v190
  %v257 = vpop.f32.mrb[0].mxu0
  %v258 = vadd.f32 %v79, %v257
  %v259 = vpop.f32.mrb[0].mxu0
  %v260 = vpop.f32.mrb[0].mxu0
  %v261 = vadd.f32 %v84, %v260
  %v262 = vpop.f32.mrb[0].mxu0
  %263 = vmatprep.mubr.bf16.mxu0 0
  %264 = vmatmul.mubr.bf16.gmra.mrb[0].mxu0 %v193
  %v265 = vpop.f32.mrb[0].mxu0
  %v266 = vadd.f32 %v89, %v265
  %v267 = vpop.f32.mrb[0].mxu0
  %v268 = vpop.f32.mrb[0].mxu0
  %v269 = vadd.f32 %v94, %v268
  %v270 = vpop.f32.mrb[0].mxu0
  %271 = vmatprep.mubr.bf16.mxu0 0
  %272 = vmatmul.mubr.bf16.gmra.mrb[0].mxu0 %v196
  %v273 = vpop.f32.mrb[0].mxu0
  %v274 = vadd.f32 %v99, %v273
  %v275 = vpop.f32.mrb[0].mxu0
  %v276 = vpop.f32.mrb[0].mxu0
  %v277 = vadd.f32 %v104, %v276
  %v278 = vpop.f32.mrb[0].mxu0
  %279 = vmatprep.mubr.bf16.mxu0 0
  %280 = vmatmul.mubr.bf16.gmra.mrb[0].mxu0 %v199
  %v281 = vpop.f32.mrb[0].mxu0
  %v282 = vadd.f32 %v109, %v281
  %v283 = vpop.f32.mrb[0].mxu0
  %v284 = vpop.f32.mrb[0].mxu0
  %v285 = vadd.f32 %v114, %v284
  %v286 = vpop.f32.mrb[0].mxu0
  %287 = vmatprep.mubr.bf16.mxu0 0
  %288 = vmatmul.mubr.bf16.gmra.mrb[0].mxu0 %v202
  %v289 = vpop.f32.mrb[0].mxu0
  %v290 = vadd.f32 %v119, %v289
  %v291 = vpop.f32.mrb[0].mxu0
  %v292 = vpop.f32.mrb[0].mxu0
  %v293 = vadd.f32 %v124, %v292
  %v294 = vpop.f32.mrb[0].mxu0
  %295 = vmatprep.mubr.bf16.mxu0 0
  %296 = vmatmul.mubr.bf16.gmra.mrb[0].mxu0 %v205
  %v297 = vpop.f32.mrb[0].mxu0
  %v298 = vadd.f32 %v129, %v297
  %v299 = vpop.f32.mrb[0].mxu0
  %v300 = vpop.f32.mrb[0].mxu0
  %v301 = vadd.f32 %v134, %v300
  %v302 = vpop.f32.mrb[0].mxu0
  %303 = vdwg.mxu0
  %v304 = vmax.f32 %v242, 0.0
  %v305 = vmax.f32 %v245, 0.0
  %v306 = vmax.f32 %v250, 0.0
  %v307 = vmax.f32 %v253, 0.0
  %v308 = vmax.f32 %v258, 0.0
  %v309 = vmax.f32 %v261, 0.0
  %v310 = vmax.f32 %v266, 0.0
  %v311 = vmax.f32 %v269, 0.0
  %v312 = vmax.f32 %v274, 0.0
  %v313 = vmax.f32 %v277, 0.0
  %v314 = vmax.f32 %v282, 0.0
  %v315 = vmax.f32 %v285, 0.0
  %v316 = vmax.f32 %v290, 0.0
  %v317 = vmax.f32 %v293, 0.0
  %v318 = vmax.f32 %v298, 0.0
  %v319 = vmax.f32 %v301, 0.0
  %v320 = vld [vmem:[%s4] sm:$0xf]
  %v321 = vpack.c.bf16 %v305, %v304
  %v322 = vpack.c.bf16 %v307, %v306
  %v323 = vpack.c.bf16 %v309, %v308
  %v324 = vpack.c.bf16 %v311, %v310
  %v325 = vpack.c.bf16 %v313, %v312
  %v326 = vpack.c.bf16 %v315, %v314
  %v327 = vpack.c.bf16 %v317, %v316
  %v328 = vpack.c.bf16 %v319, %v318
  %330 = vset.pattern.permute.xlu0 0
  %331 = vperm.xlu0 %330, %v39
  %v332 = vpop.permute.xlu0 %331
  %334 = vmatprep.subr.bf16.mxu0 0
  %335 = vmatpush1.bf16.msra.mxu0 %v321
  %336 = vmatprep.subr.bf16.mxu0 0
  %337 = vmatpush1.bf16.msra.mxu0 %v322
  %338 = vmatprep.subr.bf16.mxu0 0
  %339 = vmatpush1.bf16.msra.mxu0 %v323
  %340 = vmatprep.subr.bf16.mxu0 0
  %341 = vmatpush1.bf16.msra.mxu0 %v324
  %342 = vmatprep.subr.bf16.mxu0 0
  %343 = vmatpush1.bf16.msra.mxu0 %v325
  %344 = vmatprep.subr.bf16.mxu0 0
  %345 = vmatpush1.bf16.msra.mxu0 %v326
  %346 = vmatprep.subr.bf16.mxu0 0
  %347 = vmatpush1.bf16.msra.mxu0 %v327
  %348 = vmatprep.subr.bf16.mxu0 0
  %349 = vmatpush1.bf16.msra.mxu0 %v328
  %350 = vmatprep.subr.bf16.mxu0 0
  %351 = vmatpush1.bf16.msra.mxu0 0
  %352 = vmatprep.subr.bf16.mxu0 0
  %353 = vmatpush1.bf16.msra.mxu0 0
  %354 = vmatprep.subr.bf16.mxu0 0
  %355 = vmatpush1.bf16.msra.mxu0 0
  %356 = vmatprep.subr.bf16.mxu0 0
  %357 = vmatpush1.bf16.msra.mxu0 0
  %358 = vmatprep.subr.bf16.mxu0 0
  %359 = vmatpush1.bf16.msra.mxu0 0
  %360 = vmatprep.subr.bf16.mxu0 0
  %361 = vmatpush1.bf16.msra.mxu0 0
  %362 = vmatprep.subr.bf16.mxu0 0
  %363 = vmatpush1.bf16.msra.mxu0 0
  %364 = vmatprep.subr.bf16.mxu0 0
  %365 = vmatpush1.bf16.msra.mxu0 0
  %366 = vmatprep.mubr.bf16.mxu0 0
  %367 = vmatmul.mubr.bf16.gmra.mrb[0].mxu0 %v320
  %v368 = vpop.f32.mrb[0].mxu0
  %v369 = vadd.f32 %v332, %v368
  %v370 = vpop.f32.mrb[0].mxu0
  %v371 = vpop.f32.mrb[0].mxu0
  %v372 = vpop.f32.mrb[0].mxu0
  %373 = vdwg.mxu0
  %v374 = vtanh.pop %v369
  %v375 = vmul.f32 %v369, 1.442695
  %v376 = vpow.pop %v375
  %v377 = vadd.f32 %v376, 1.0
  %v378 = vld [vmem:[%s1] sm:$0xf]
  %v380 = vrot.slane %v378, 4
  %v382 = vmul.f32 %v377, %v380
  %v384 = vrot.slane %v382, 4
  %v386 = vadd.f32 %v374, %v384
  %vm387 = vcmask 60416
  %388 = vst.msk [vmem:[%s5] sm:$0xf] %vm387, %v386
  %389 = vst.msk [vmem:[%s5 + $0x4] sm:$0xf] %vm387, %v374
  %vm390 = vcmask 64516
  %391 = vst.msk [vmem:[%s5 + $0x4] sm:$0xf0] %vm390, %v377
  // Predicated region
  $region22: #{tpu_custom_call.1} parent=0 // pred_check
    _
  $region23: #{tpu_custom_call.1} parent=0 // pred_check_branch
    %393 = sbr.rel (0) target = $region25
  $region24: #{tpu_custom_call.1} parent=0 // pred_region
    _
  $region25: #{tpu_custom_call.1} parent=0 // pred_fallthru
    _
  // Predicated region
  $region26: #{tpu_custom_call.1} parent=0 // pred_check
    _
  $region27: #{tpu_custom_call.1} parent=0 // pred_check_branch
    %395 = sbr.rel (0) target = $region29
  $region28: #{tpu_custom_call.1} parent=0 // pred_region
    _
  $region29: #{tpu_custom_call.1} parent=0 // pred_fallthru
    _

</llo_original>
